<compile_context>
chip_gen: v7x
topology: tpu7x:2x2x1
jax: 0.10.0
libtpu: 0.0.40
codegen_flags: <defaults>
</compile_context>

<pallas_src>
import jax
import jax.numpy as jnp
from jax import lax
from jax.experimental import pallas as pl
from jax.experimental.pallas import tpu as pltpu


def _round_up(x, m):
    return ((x + m - 1) // m) * m


def _cdiv(a, b):
    return (a + b - 1) // b


def mlp_remain_kernel(x_ref, w1_ref, b1_ref, w2_ref, b2_ref, o_ref):
    # x_ref: (tn, 2H)  w1_ref: (2H, H)  b1_ref: (1, H)
    # w2_ref: (1, H)   b2_ref: (1,) in SMEM   o_ref: (1, tn)
    x = x_ref[...]
    h = jnp.dot(x, w1_ref[...], preferred_element_type=jnp.float32)   # (tn, H)
    h = jnp.maximum(h + b1_ref[...], 0.0)                             # ReLU (f32)
    # Second layer, lane-dense: contract (1,H) with (tn,H) over H -> (1, tn).
    y = lax.dot_general(
        w2_ref[...], h,
        dimension_numbers=(((1,), (1,)), ((), ())),
        preferred_element_type=jnp.float32,
    )
    y = y + b2_ref[0]                                                 # scalar bias
    o_ref[...] = jax.nn.sigmoid(y).astype(o_ref.dtype)                # (1, tn)


def _choose_tile(N, tile_n):
    """Pick the batch tile: big enough to amortize per-step overhead, small
    enough to keep >=2 grid steps (v7x megacore) and stay within the batch."""
    if N <= 128:
        return N                                  # single full-array block
    tn = min(tile_n, _round_up(N, 128))
    if N >= 256:
        tn = min(tn, _round_up(_cdiv(N, 2), 128))  # keep grid >= 2
    return max(128, _round_up(tn, 128))


def mlp_for_remain(x, w1, b1, w2, b2, *, tile_n=8192):
    """x: (N, 2H).  Returns (N, 1) = sigmoid(relu(x@w1+b1)@w2+b2), dtype of x.

    w1: (2H, H), b1: (H,) or (1, H), w2: (H, 1) or (1, H), b2: scalar-like.
    """
    N, in_dim = x.shape
    H = w1.shape[1]
    assert in_dim == 2 * H

    # Parameters are tiny: keep them f32 for accuracy; x streams in natively.
    w1_f = jnp.asarray(w1, jnp.float32)
    b1_row = jnp.asarray(b1, jnp.float32).reshape(1, H)
    w2_row = jnp.asarray(w2, jnp.float32).reshape(1, H)
    b2_s = jnp.asarray(b2, jnp.float32).reshape(1)

    tn = _choose_tile(N, tile_n)
    grid = (_cdiv(N, tn),)

    # VMEM budget: double-buffered x tile + double-buffered output row + weights.
    x_bytes = x.dtype.itemsize
    x_tile_bytes = tn * in_dim * x_bytes
    out_tile_bytes = tn * x_bytes
    w_bytes = (in_dim * H + 2 * H + 1) * 4
    vmem_need = 2 * (x_tile_bytes + out_tile_bytes) + w_bytes
    vmem_limit = int(min(64 * 2**20, max(32 * 2**20, 2 * vmem_need)))

    cost = pl.CostEstimate(
        flops=int(2 * N * in_dim * H + 2 * N * H),
        transcendentals=int(N),
        bytes_accessed=int(N * in_dim * x_bytes + w_bytes + N * x_bytes),
    )

    out = pl.pallas_call(
        mlp_remain_kernel,
        out_shape=jax.ShapeDtypeStruct((1, N), x.dtype),
        grid_spec=pltpu.PrefetchScalarGridSpec(
            num_scalar_prefetch=0,
            grid=grid,
            in_specs=[
                # Batch-row tile of x; weights / biases are whole-array blocks.
                pl.BlockSpec((tn, in_dim), lambda i: (i, 0)),
                pl.BlockSpec((in_dim, H), lambda i: (0, 0)),
                pl.BlockSpec((1, H), lambda i: (0, 0)),
                pl.BlockSpec((1, H), lambda i: (0, 0)),
                # Scalar bias lives in SMEM (no padded VMEM tile, no vector load).
                pl.BlockSpec(memory_space=pltpu.MemorySpace.SMEM),
            ],
            out_specs=pl.BlockSpec((1, tn), lambda i: (0, i)),
        ),
        compiler_params=pltpu.CompilerParams(
            dimension_semantics=("parallel",),
            vmem_limit_bytes=vmem_limit,
        ),
        cost_estimate=cost,
    )(x, w1_f, b1_row, w2_row, b2_s)

    # (1, N) lane-dense kernel output -> (N, 1) module output.
    return out.reshape(N, 1)


def _reference(x, w1, b1, w2, b2):
    h = jnp.maximum(x.astype(jnp.float32) @ jnp.asarray(w1, jnp.float32)
                    + jnp.asarray(b1, jnp.float32).reshape(1, -1), 0.0)
    y = jax.nn.sigmoid(h @ jnp.asarray(w2, jnp.float32).reshape(-1, 1)
                       + jnp.asarray(b2, jnp.float32).reshape(1, 1))
    return y.astype(x.dtype)


if __name__ == "__main__":
    hidden_dim = 32

    key = jax.random.PRNGKey(0)
    kx, kw1, kb1, kw2, kb2, kx2 = jax.random.split(key, 6)

    # Deterministic synthetic parameters (shapes from nn.Linear in __init__).
    w1 = jax.random.normal(kw1, (2 * hidden_dim, hidden_dim), dtype=jnp.float32) * 0.1
    b1 = jax.random.normal(kb1, (hidden_dim,), dtype=jnp.float32) * 0.1
    w2 = jax.random.normal(kw2, (hidden_dim, 1), dtype=jnp.float32) * 0.1
    b2 = jax.random.normal(kb2, (1,), dtype=jnp.float32) * 0.1

    # Small batch (single full-array block path).
    N1 = 8
    x1 = jax.random.normal(kx, (N1, 2 * hidden_dim), dtype=jnp.float32)
    out1 = jax.block_until_ready(mlp_for_remain(x1, w1, b1, w2, b2))
    ref1 = _reference(x1, w1, b1, w2, b2)
    assert out1.shape == (N1, 1)
    assert jnp.allclose(out1, ref1, atol=1e-5, rtol=1e-5)

    # Larger, non-tile-aligned batch: default tile -> grid>=2 with a masked
    # partial tail block (no wrapper padding copy).
    N2 = 2000
    x2 = jax.random.normal(kx2, (N2, 2 * hidden_dim), dtype=jnp.float32)
    out2 = jax.block_until_ready(mlp_for_remain(x2, w1, b1, w2, b2))
    ref2 = _reference(x2, w1, b1, w2, b2)
    assert out2.shape == (N2, 1)
    assert jnp.allclose(out2, ref2, atol=1e-5, rtol=1e-5)

    # Same batch with an explicit smaller tile (multi-step grid path).
    out3 = jax.block_until_ready(mlp_for_remain(x2, w1, b1, w2, b2, tile_n=512))
    assert jnp.allclose(out3, ref2, atol=1e-5, rtol=1e-5)

    print("KERNEL_OK")
</pallas_src>

<mosaic_0001>
module attributes {stable_mosaic.version = 11 : i64} {
  func.func @mlp_remain_kernel(%arg0: i32, %arg1: memref<8x64xf32, #tpu.memory_space<vmem>>, %arg2: memref<64x32xf32, #tpu.memory_space<vmem>>, %arg3: memref<1x32xf32, #tpu.memory_space<vmem>>, %arg4: memref<1x32xf32, #tpu.memory_space<vmem>>, %arg5: memref<1xf32, #tpu.memory_space<smem>>, %arg6: memref<1x8xf32, #tpu.memory_space<vmem>>) attributes {dimension_semantics = [#tpu.dimension_semantics<parallel>], iteration_bounds = array<i64: 1>, scalar_prefetch = 0 : i64, scratch_operands = 0 : i64, tpu.core_type = #tpu.core_type<tc>, window_params = [{transform_indices = @transform_0, window_bounds = array<i64: 8, 64>}, {pipeline_mode = #tpu.pipeline_mode<synchronous>, transform_indices = @transform_1, window_bounds = array<i64: 64, 32>}, {pipeline_mode = #tpu.pipeline_mode<synchronous>, transform_indices = @transform_2, window_bounds = array<i64: 1, 32>}, {pipeline_mode = #tpu.pipeline_mode<synchronous>, transform_indices = @transform_3, window_bounds = array<i64: 1, 32>}, {transform_indices = @transform_4, window_bounds = array<i64: 1>}, {transform_indices = @transform_5, window_bounds = array<i64: 1, 8>}]} {
    %c0 = arith.constant 0 : index
    %c0_0 = arith.constant 0 : index
    %0 = vector.load %arg1[%c0, %c0_0] : memref<8x64xf32, #tpu.memory_space<vmem>>, vector<8x64xf32>
    %c0_1 = arith.constant 0 : index
    %c0_2 = arith.constant 0 : index
    %1 = vector.load %arg2[%c0_1, %c0_2] : memref<64x32xf32, #tpu.memory_space<vmem>>, vector<64x32xf32>
    %cst = arith.constant dense<0.000000e+00> : vector<8x32xf32>
    %2 = tpu.matmul %0, %1, %cst {dimension_numbers = #tpu.dot_dimension_numbers<[1], [0], [0], [1], [0, 0, 1, 1], [], []>} : vector<8x64xf32>, vector<64x32xf32>, vector<8x32xf32> -> vector<8x32xf32>
    %c0_3 = arith.constant 0 : index
    %c0_4 = arith.constant 0 : index
    %3 = vector.load %arg3[%c0_3, %c0_4] : memref<1x32xf32, #tpu.memory_space<vmem>>, vector<1x32xf32>
    %4 = vector.broadcast %3 : vector<1x32xf32> to vector<8x32xf32>
    %5 = arith.addf %2, %4 : vector<8x32xf32>
    %cst_5 = arith.constant 0.000000e+00 : f32
    %6 = vector.broadcast %cst_5 : f32 to vector<8x32xf32>
    %7 = arith.maximumf %5, %6 : vector<8x32xf32>
    %c0_6 = arith.constant 0 : index
    %c0_7 = arith.constant 0 : index
    %8 = vector.load %arg4[%c0_6, %c0_7] : memref<1x32xf32, #tpu.memory_space<vmem>>, vector<1x32xf32>
    %cst_8 = arith.constant dense<0.000000e+00> : vector<1x8xf32>
    %9 = tpu.matmul %8, %7, %cst_8 {dimension_numbers = #tpu.dot_dimension_numbers<[1], [1], [0], [0], [0, 0, 1, 0], [], []>} : vector<1x32xf32>, vector<8x32xf32>, vector<1x8xf32> -> vector<1x8xf32>
    %c0_9 = arith.constant 0 : index
    %10 = memref.load %arg5[%c0_9] : memref<1xf32, #tpu.memory_space<smem>>
    %11 = vector.broadcast %10 : f32 to vector<1x8xf32>
    %12 = arith.addf %9, %11 : vector<1x8xf32>
    %13 = arith.negf %12 : vector<1x8xf32>
    %14 = math.exp %13 : vector<1x8xf32>
    %cst_10 = arith.constant 1.000000e+00 : f32
    %15 = vector.broadcast %cst_10 : f32 to vector<1x8xf32>
    %16 = arith.addf %15, %14 : vector<1x8xf32>
    %17 = arith.divf %15, %16 : vector<1x8xf32>
    %c0_11 = arith.constant 0 : index
    %c0_12 = arith.constant 0 : index
    %18 = vector.load %arg6[%c0_11, %c0_12] : memref<1x8xf32, #tpu.memory_space<vmem>>, vector<1x8xf32>
    tpu.vector_store %arg6[%c0_11, %c0_12], %17 {strides = array<i32>} : memref<1x8xf32, #tpu.memory_space<vmem>>, vector<1x8xf32>,
    return
  }
  func.func @transform_0(%arg0: i32) -> (i32, i32) {
    %c0_i32 = arith.constant 0 : i32
    %c0_i32_0 = arith.constant 0 : i32
    return %arg0, %c0_i32 : i32, i32
  }
  func.func @transform_1(%arg0: i32) -> (i32, i32) {
    %c0_i32 = arith.constant 0 : i32
    %c0_i32_0 = arith.constant 0 : i32
    %c0_i32_1 = arith.constant 0 : i32
    return %c0_i32, %c0_i32_0 : i32, i32
  }
  func.func @transform_2(%arg0: i32) -> (i32, i32) {
    %c0_i32 = arith.constant 0 : i32
    %c0_i32_0 = arith.constant 0 : i32
    %c0_i32_1 = arith.constant 0 : i32
    return %c0_i32, %c0_i32_0 : i32, i32
  }
  func.func @transform_3(%arg0: i32) -> (i32, i32) {
    %c0_i32 = arith.constant 0 : i32
    %c0_i32_0 = arith.constant 0 : i32
    %c0_i32_1 = arith.constant 0 : i32
    return %c0_i32, %c0_i32_0 : i32, i32
  }
  func.func @transform_4(%arg0: i32) -> i32 {
    %c0_i32 = arith.constant 0 : i32
    %c0_i32_0 = arith.constant 0 : i32
    return %c0_i32 : i32
  }
  func.func @transform_5(%arg0: i32) -> (i32, i32) {
    %c0_i32 = arith.constant 0 : i32
    %c0_i32_0 = arith.constant 0 : i32
    return %c0_i32, %arg0 : i32, i32
  }
}

</mosaic_0001>

<llo_original>
// kernel: tpu_custom_call.1
$region0: #{tpu_custom_call.1}
  #allocation0 [shape = 'u32[]', space=smem, size = 0x4, offset = 0x4, fixed_abs, tag = 'smem constant byte address 0x4 - core index']
  #allocation1 [shape = 'u32[144,128]{1,0:T(1,128)}', space=vmem, size = 0x12000, scoped, tag = 'internal scratch']
  #allocation2 [shape = 'f32[1]{0:T(128)S(6)}', space=smem, size = 0x200, scoped, tag = 'scoped memory for tpu_custom_call.1']
  %s0 = inlined_call_operand.vmem [shape: f32[8,64], index: 0, kind: input, shape index: {}]
  %s1 = inlined_call_operand.vmem [shape: f32[64,32], index: 1, kind: input, shape index: {}]
  %s2 = inlined_call_operand.vmem [shape: f32[1,32], index: 2, kind: input, shape index: {}]
  %s3 = inlined_call_operand.vmem [shape: f32[1,32], index: 3, kind: input, shape index: {}]
  %s4 = inlined_call_operand.<no memory space> [shape: f32[1], index: 4, kind: input, shape index: {}]
  %s5 = inlined_call_operand.hbm [shape: f32[1,8], index: 5, kind: output, shape index: {}]
  %s6 = sld [smem:[#allocation0]]
  $region30: #{tpu_custom_call.1} parent=0
    _
  %s8 = ssub.s32 1, %s6
  %s9 = scalar_select 0, %s8, %s6
  %10 = sst [smem:[#allocation2]] %s4
  $region1: #{tpu_custom_call.1} parent=0
    #allocation3 [shape = 'u8[512]{0}', space=vmem, size = 0x400, scoped, tag = 'output window, operand 0, single buffered']
    #allocation4 [shape = 's32[1]{0}', space=sflag, size = 0x4, scoped, tag = 'scoped memory for tpu_custom_call.1']
    %11 = vsyncpa [#allocation4], 0
    // Predicated region
    $region2: #{tpu_custom_call.1} parent=1 // pred_check
      _
    $region3: #{tpu_custom_call.1} parent=1 // pred_check_branch
      %13 = sbr.rel (0) target = $region5
    $region4: #{tpu_custom_call.1} parent=1 // pred_region
      _
    $region5: #{tpu_custom_call.1} parent=1 // pred_fallthru
      _
    // Predicated region
    $region6: #{tpu_custom_call.1} parent=1 // pred_check
      _
    $region7: #{tpu_custom_call.1} parent=1 // pred_check_branch
      %15 = sbr.rel (0) target = $region9
    $region8: #{tpu_custom_call.1} parent=1 // pred_region
      _
    $region9: #{tpu_custom_call.1} parent=1 // pred_fallthru
      _
    // Predicated region
    $region10: #{tpu_custom_call.1} parent=1 // pred_check
      _
    $region11: #{tpu_custom_call.1} parent=1 // pred_check_branch
      %17 = sbr.rel (0) target = $region13
    $region12: #{tpu_custom_call.1} parent=1 // pred_region
      _
    $region13: #{tpu_custom_call.1} parent=1 // pred_fallthru
      _
    // Predicated region
    $region14: #{tpu_custom_call.1} parent=1 // pred_check
      _
    $region15: #{tpu_custom_call.1} parent=1 // pred_check_branch
      %19 = sbr.rel (0) target = $region17
    $region16: #{tpu_custom_call.1} parent=1 // pred_region
      _
    $region17: #{tpu_custom_call.1} parent=1 // pred_fallthru
      _
    // Predicated region
    $region18: #{tpu_custom_call.1} parent=1 // pred_check
      _
    $region19: #{tpu_custom_call.1} parent=1 // pred_check_branch
      %21 = sbr.rel (0) target = $region21
    $region20: #{tpu_custom_call.1} parent=1 // pred_region
      _
    $region21: #{tpu_custom_call.1} parent=1 // pred_fallthru
      _
    %v22 = vld [vmem:[%s0] sm:$0xff]
    %v23 = vld [vmem:[%s1] sm:$0xff]
    %v24 = vld [vmem:[%s1 + $0x8] sm:$0xff]
    %v25 = vld [vmem:[%s1 + $0x10] sm:$0xff]
    %v26 = vld [vmem:[%s1 + $0x18] sm:$0xff]
    %v27 = vld [vmem:[%s1 + $0x20] sm:$0xff]
    %v28 = vld [vmem:[%s1 + $0x28] sm:$0xff]
    %v29 = vld [vmem:[%s1 + $0x30] sm:$0xff]
    %v30 = vld [vmem:[%s1 + $0x38] sm:$0xff]
    %v31 = vld [vmem:[%s2] sm:$0x1]
    %v33 = vlaneseq
    %v34 = vshrl.u32 %v33, 7
    %v35 = vsub.s32 0, %v34
    %v36 = vrot.slane %v31, %v35
    %vm38 = vcmask 523264
    %v40 = vsel %vm38, %v22, 0
    %42 = vmatprep.subr.mxu0 0.0
    %43 = vmatpush1.msra.mxu0 %v23
    %44 = vmatprep.subr.mxu0 0.0
    %45 = vmatpush1.msra.mxu0 %v24
    %46 = vmatprep.subr.mxu0 0.0
    %47 = vmatpush1.msra.mxu0 %v25
    %48 = vmatprep.subr.mxu0 0.0
    %49 = vmatpush1.msra.mxu0 %v26
    %50 = vmatprep.subr.mxu0 0.0
    %51 = vmatpush1.msra.mxu0 %v27
    %52 = vmatprep.subr.mxu0 0.0
    %53 = vmatpush1.msra.mxu0 %v28
    %54 = vmatprep.subr.mxu0 0.0
    %55 = vmatpush1.msra.mxu0 %v29
    %56 = vmatprep.subr.mxu0 0.0
    %57 = vmatpush1.msra.mxu0 %v30
    %58 = vmatprep.subr.mxu0 0.0
    %59 = vmatpush1.msra.mxu0 0.0
    %60 = vmatprep.subr.mxu0 0.0
    %61 = vmatpush1.msra.mxu0 0.0
    %62 = vmatprep.subr.mxu0 0.0
    %63 = vmatpush1.msra.mxu0 0.0
    %64 = vmatprep.subr.mxu0 0.0
    %65 = vmatpush1.msra.mxu0 0.0
    %66 = vmatprep.subr.mxu0 0.0
    %67 = vmatpush1.msra.mxu0 0.0
    %68 = vmatprep.subr.mxu0 0.0
    %69 = vmatpush1.msra.mxu0 0.0
    %70 = vmatprep.subr.mxu0 0.0
    %71 = vmatpush1.msra.mxu0 0.0
    %72 = vmatprep.subr.mxu0 0.0
    %73 = vmatpush1.msra.mxu0 0.0
    %74 = vmatprep.subr.mxu0 0.0
    %75 = vmatpush1.msra.mxu0 0.0
    %76 = vmatprep.subr.mxu0 0.0
    %77 = vmatpush1.msra.mxu0 0.0
    %78 = vmatprep.subr.mxu0 0.0
    %79 = vmatpush1.msra.mxu0 0.0
    %80 = vmatprep.subr.mxu0 0.0
    %81 = vmatpush1.msra.mxu0 0.0
    %82 = vmatprep.subr.mxu0 0.0
    %83 = vmatpush1.msra.mxu0 0.0
    %84 = vmatprep.subr.mxu0 0.0
    %85 = vmatpush1.msra.mxu0 0.0
    %86 = vmatprep.subr.mxu0 0.0
    %87 = vmatpush1.msra.mxu0 0.0
    %88 = vmatprep.subr.mxu0 0.0
    %89 = vmatpush1.msra.mxu0 0.0
    %90 = vmatprep.subr.mxu0 0.0
    %91 = vmatpush1.msra.mxu0 0.0
    %92 = vmatprep.subr.mxu0 0.0
    %93 = vmatpush1.msra.mxu0 0.0
    %94 = vmatprep.subr.mxu0 0.0
    %95 = vmatpush1.msra.mxu0 0.0
    %96 = vmatprep.subr.mxu0 0.0
    %97 = vmatpush1.msra.mxu0 0.0
    %98 = vmatprep.subr.mxu0 0.0
    %99 = vmatpush1.msra.mxu0 0.0
    %100 = vmatprep.subr.mxu0 0.0
    %101 = vmatpush1.msra.mxu0 0.0
    %102 = vmatprep.subr.mxu0 0.0
    %103 = vmatpush1.msra.mxu0 0.0
    %104 = vmatprep.subr.mxu0 0.0
    %105 = vmatpush1.msra.mxu0 0.0
    %106 = vmatprep.mubr.f32.mxu0 0.0
    %107 = vmatmul.mubr.f32.gmra.mrb[0].mxu0 %v40
    %v108 = vpop.f32.mrb[0].mxu0
    %v109 = vadd.f32 %v36, %v108
    %v110 = vpop.f32.mrb[0].mxu0
    %111 = vdwg.mxu0
    %v112 = vmax.f32 %v109, 0.0
    %v113 = vld [vmem:[%s3] sm:$0x1]
    %s114 = sld [smem:[#allocation2]]
    %v115 = vstv %s114
    %vm116 = vcmask 261120
    %v118 = vsel %vm116, %v113, 0
    %v121 = vsel %vm116, %v112, 0
    %123 = vmatprep.subr.mxu0 0.0
    %124 = vmatpush1.xpose.msra.mxu0 %v121
    %125 = vmatprep.subr.mxu0 0.0
    %126 = vmatpush1.xpose.msra.mxu0 0.0
    %127 = vmatprep.subr.mxu0 0.0
    %128 = vmatpush1.xpose.msra.mxu0 0.0
    %129 = vmatprep.subr.mxu0 0.0
    %130 = vmatpush1.xpose.msra.mxu0 0.0
    %131 = vmatprep.subr.mxu0 0.0
    %132 = vmatpush1.xpose.msra.mxu0 0.0
    %133 = vmatprep.subr.mxu0 0.0
    %134 = vmatpush1.xpose.msra.mxu0 0.0
    %135 = vmatprep.subr.mxu0 0.0
    %136 = vmatpush1.xpose.msra.mxu0 0.0
    %137 = vmatprep.subr.mxu0 0.0
    %138 = vmatpush1.xpose.msra.mxu0 0.0
    %139 = vmatprep.subr.mxu0 0.0
    %140 = vmatpush1.xpose.msra.mxu0 0.0
    %141 = vmatprep.subr.mxu0 0.0
    %142 = vmatpush1.xpose.msra.mxu0 0.0
    %143 = vmatprep.subr.mxu0 0.0
    %144 = vmatpush1.xpose.msra.mxu0 0.0
    %145 = vmatprep.subr.mxu0 0.0
    %146 = vmatpush1.xpose.msra.mxu0 0.0
    %147 = vmatprep.subr.mxu0 0.0
    %148 = vmatpush1.xpose.msra.mxu0 0.0
    %149 = vmatprep.subr.mxu0 0.0
    %150 = vmatpush1.xpose.msra.mxu0 0.0
    %151 = vmatprep.subr.mxu0 0.0
    %152 = vmatpush1.xpose.msra.mxu0 0.0
    %153 = vmatprep.subr.mxu0 0.0
    %154 = vmatpush1.xpose.msra.mxu0 0.0
    %155 = vmatprep.subr.mxu0 0.0
    %156 = vmatpush1.xpose.msra.mxu0 0.0
    %157 = vmatprep.subr.mxu0 0.0
    %158 = vmatpush1.xpose.msra.mxu0 0.0
    %159 = vmatprep.subr.mxu0 0.0
    %160 = vmatpush1.xpose.msra.mxu0 0.0
    %161 = vmatprep.subr.mxu0 0.0
    %162 = vmatpush1.xpose.msra.mxu0 0.0
    %163 = vmatprep.subr.mxu0 0.0
    %164 = vmatpush1.xpose.msra.mxu0 0.0
    %165 = vmatprep.subr.mxu0 0.0
    %166 = vmatpush1.xpose.msra.mxu0 0.0
    %167 = vmatprep.subr.mxu0 0.0
    %168 = vmatpush1.xpose.msra.mxu0 0.0
    %169 = vmatprep.subr.mxu0 0.0
    %170 = vmatpush1.xpose.msra.mxu0 0.0
    %171 = vmatprep.subr.mxu0 0.0
    %172 = vmatpush1.xpose.msra.mxu0 0.0
    %173 = vmatprep.subr.mxu0 0.0
    %174 = vmatpush1.xpose.msra.mxu0 0.0
    %175 = vmatprep.subr.mxu0 0.0
    %176 = vmatpush1.xpose.msra.mxu0 0.0
    %177 = vmatprep.subr.mxu0 0.0
    %178 = vmatpush1.xpose.msra.mxu0 0.0
    %179 = vmatprep.subr.mxu0 0.0
    %180 = vmatpush1.xpose.msra.mxu0 0.0
    %181 = vmatprep.subr.mxu0 0.0
    %182 = vmatpush1.xpose.msra.mxu0 0.0
    %183 = vmatprep.subr.mxu0 0.0
    %184 = vmatpush1.xpose.msra.mxu0 0.0
    %185 = vmatprep.subr.mxu0 0.0
    %186 = vmatpush1.xpose.msra.mxu0 0.0
    %187 = vmatprep.mubr.f32.mxu0 0.0
    %188 = vmatmul.mubr.f32.gmra.mrb[0].mxu0 %v118
    %v189 = vpop.f32.mrb[0].mxu0
    %v190 = vadd.f32 %v115, %v189
    %v191 = vpop.f32.mrb[0].mxu0
    %192 = vdwg.mxu0
    %v193 = vxor.u32 %v190, 2147483648
    %v194 = vmul.f32 %v193, 1.442695
    %v195 = vpow.pop %v194
    %v196 = vadd.f32 %v195, 1.0
    %v197 = vrcp.pop %v196
    %v198 = vmul.f32 1.0, %v197
    %vm199 = vcmask 57344
    %200 = vst.msk [vmem:[#allocation3] sm:$0x1] %vm199, %v198
    // Predicated region
    $region22: #{tpu_custom_call.1} parent=1 // pred_check
      _
    $region23: #{tpu_custom_call.1} parent=1 // pred_check_branch
      %202 = sbr.rel (0) target = $region25
    $region24: #{tpu_custom_call.1} parent=1 // pred_region
      %s204 = ssub.s32 16, 16
      %205 = vsyncadd [#allocation4], %s204
      %s207 = sshll.u32 [#allocation3], 4
      %s208 = int_to_ptr.vmem [resolvable:$true] %s207
      %210 = dma.vmem_to_hbm [thread:$0]  %s208, 16, %s5, [#allocation4]
    $region25: #{tpu_custom_call.1} parent=1 // pred_fallthru
      _
    // Predicated region
    $region26: #{tpu_custom_call.1} parent=1 // pred_check
      _
    $region27: #{tpu_custom_call.1} parent=1 // pred_check_branch
      %212 = sbr.rel (0) target = $region29
    $region28: #{tpu_custom_call.1} parent=1 // pred_region
      %213 = dma.done [#allocation4], 16
    $region29: #{tpu_custom_call.1} parent=1 // pred_fallthru
      _
    %214 = vsyncpa [#allocation4], 1

</llo_original>
